<compile_context>
chip_gen: v5e
topology: v5e:2x2
jax: 0.10.0
libtpu: 0.0.40
codegen_flags: <defaults>
</compile_context>

<pallas_src>
import functools

import jax
import jax.numpy as jnp
from jax.experimental import pallas as pl
from jax.experimental.pallas import tpu as pltpu


_NEG = -1e30  # column-padding value: exp(_NEG - max) == 0 in the f32 logsumexp


def _bigram_loss_kernel(n_valid, inv_n, ids_ref, tgt_ref, emb_ref,
                        logits_ref, loss_ref):
    """One grid step = TM flattened token positions (gather + CE partial)."""
    i = pl.program_id(0)
    TM, Cp = logits_ref.shape
    Vr = emb_ref.shape[0]

    @pl.when(i == 0)
    def _init():
        loss_ref[...] = jnp.zeros_like(loss_ref)

    # One-hot gather of TM embedding rows on the MXU.
    ids = ids_ref[...]                                            # (TM, 1) i32
    row = jax.lax.broadcasted_iota(jnp.int32, (TM, Vr), 1)
    onehot = (row == ids).astype(jnp.float32)                     # (TM, Vr)
    logits = jnp.dot(onehot, emb_ref[...],
                     preferred_element_type=jnp.float32,
                     precision=jax.lax.Precision.HIGHEST)         # (TM, Cp)
    logits_ref[...] = logits                                      # dense tile store

    # Stable row-wise logsumexp (padded lanes hold _NEG -> exp == 0).
    m = jnp.max(logits, axis=-1, keepdims=True)                   # (TM, 1)
    s = jnp.sum(jnp.exp(logits - m), axis=-1, keepdims=True)      # (TM, 1)
    lse = m + jnp.log(s)

    # Target logit via a lane one-hot on the whole (TM, Cp) tile.
    lane = jax.lax.broadcasted_iota(jnp.int32, (TM, Cp), 1)
    tgt = tgt_ref[...]                                            # (TM, 1) i32
    tgt_logit = jnp.sum(jnp.where(lane == tgt, logits, 0.0),
                        axis=-1, keepdims=True)                   # (TM, 1)

    # Mask padding rows, reduce once per block, single accumulator add.
    grow = i * TM + jax.lax.broadcasted_iota(jnp.int32, (TM, 1), 0)
    nll = jnp.where(grow < n_valid, lse - tgt_logit, 0.0)
    loss_ref[...] += jnp.sum(nll, axis=0, keepdims=True)

    @pl.when(i == pl.num_programs(0) - 1)
    def _finalize():
        loss_ref[...] = loss_ref[...] * inv_n   # mean reduction (constant mul)


def _bigram_gather_kernel(ids_ref, emb_ref, logits_ref):
    """Inference path: blocked embedding-row gather only, no cross entropy."""
    TM, _ = logits_ref.shape
    Vr = emb_ref.shape[0]
    ids = ids_ref[...]
    row = jax.lax.broadcasted_iota(jnp.int32, (TM, Vr), 1)
    onehot = (row == ids).astype(jnp.float32)
    logits_ref[...] = jnp.dot(onehot, emb_ref[...],
                              preferred_element_type=jnp.float32,
                              precision=jax.lax.Precision.HIGHEST)


def bigram_forward(index, emb_table, targets=None, *, tm=128):
    """Mirrors BigramLanguageModel.forward(index, targets)."""
    B, T = index.shape
    V, C = emb_table.shape
    N = B * T

    TM = tm
    Cp = max(128, ((C + 127) // 128) * 128)      # lane-dense embedding dim
    Vr = max(8, ((V + 7) // 8) * 8)              # sublane-aligned row count
    Np = ((N + TM - 1) // TM) * TM               # token rows, padded to TM
    G = Np // TM

    # Pad the table once. Rows beyond V have zero one-hot coefficient, so plain
    # zeros are fine there; columns beyond C hold _NEG so logsumexp ignores them.
    if (Vr, Cp) == (V, C):
        emb_p = emb_table.astype(jnp.float32)
    else:
        emb_p = jnp.zeros((Vr, Cp), jnp.float32)
        emb_p = emb_p.at[:V, :C].set(emb_table.astype(jnp.float32))
        if Cp > C:
            emb_p = emb_p.at[:, C:].set(_NEG)

    # index.transpose(0, 1).contiguous() -> (T, B), flattened row-major.
    ids = jnp.transpose(index).reshape(N).astype(jnp.int32)
    if Np > N:
        ids = jnp.concatenate([ids, jnp.zeros((Np - N,), jnp.int32)])
    ids = ids.reshape(Np, 1)

    table_bytes = Vr * Cp * 4
    tile_bytes = TM * Cp * 4
    vmem_limit = int(min(max(table_bytes + 6 * tile_bytes + (1 << 20),
                             32 * 1024 * 1024),
                         100 * 1024 * 1024))
    # TODO(synk): for vocabularies whose padded table exceeds VMEM (notably the
    # 64 MiB budget on v7x), fall back to a manually double-buffered DMA row
    # gather (memory_space=pl.ANY + make_async_copy) instead of the resident
    # table; not needed at these sizes.

    if targets is None:
        grid_spec = pltpu.PrefetchScalarGridSpec(
            num_scalar_prefetch=0,
            grid=(G,),
            in_specs=[pl.BlockSpec((TM, 1), lambda i: (i, 0)),
                      pl.BlockSpec((Vr, Cp), lambda i: (0, 0))],   # resident table
            out_specs=pl.BlockSpec((TM, Cp), lambda i: (i, 0)),
        )
        logits_p = pl.pallas_call(
            _bigram_gather_kernel,
            out_shape=jax.ShapeDtypeStruct((Np, Cp), jnp.float32),
            grid_spec=grid_spec,
            compiler_params=pltpu.CompilerParams(
                dimension_semantics=("parallel",),
                vmem_limit_bytes=vmem_limit),
            cost_estimate=pl.CostEstimate(
                flops=2 * Np * Vr * Cp, transcendentals=0,
                bytes_accessed=table_bytes + Np * Cp * 4 + Np * 4),
        )(ids, emb_p)
        logits = logits_p[:N, :C].reshape(T, B, C)
        return logits, jnp.float32(0.0)

    # targets.view(B*T): row-major flatten of the ORIGINAL (B, T) layout
    # (this asymmetry vs the transposed ids faithfully mirrors the PyTorch code).
    tgt = targets.reshape(N).astype(jnp.int32)
    if Np > N:
        tgt = jnp.concatenate([tgt, jnp.zeros((Np - N,), jnp.int32)])
    tgt = tgt.reshape(Np, 1)

    grid_spec = pltpu.PrefetchScalarGridSpec(
        num_scalar_prefetch=0,
        grid=(G,),
        in_specs=[pl.BlockSpec((TM, 1), lambda i: (i, 0)),
                  pl.BlockSpec((TM, 1), lambda i: (i, 0)),
                  pl.BlockSpec((Vr, Cp), lambda i: (0, 0))],       # resident table
        out_specs=(pl.BlockSpec((TM, Cp), lambda i: (i, 0)),
                   pl.BlockSpec((1, 1), lambda i: (0, 0))),        # resident loss acc
    )
    logits_p, loss = pl.pallas_call(
        functools.partial(_bigram_loss_kernel, N, 1.0 / N),
        out_shape=(jax.ShapeDtypeStruct((Np, Cp), jnp.float32),
                   jax.ShapeDtypeStruct((1, 1), jnp.float32)),
        grid_spec=grid_spec,
        compiler_params=pltpu.CompilerParams(
            dimension_semantics=("arbitrary",),   # loss-accumulation axis
            vmem_limit_bytes=vmem_limit),
        cost_estimate=pl.CostEstimate(
            flops=2 * Np * Vr * Cp + 8 * Np * Cp,
            transcendentals=Np * Cp + Np,
            bytes_accessed=table_bytes + Np * Cp * 4 + 2 * Np * 4 + 4),
    )(ids, tgt, emb_p)
    # TODO(synk): on v7x (2 TensorCores) emit per-core partial NLL sums on a
    # "parallel" leading grid axis and reduce in the wrapper to unlock megacore.

    logits = logits_p if (Np, Cp) == (N, C) else logits_p[:N, :C]
    return logits, loss[0, 0]


def _reference_forward(index, emb_table, targets):
    """Pure-JAX reference matching the PyTorch semantics."""
    B, T = index.shape
    logits = emb_table[jnp.transpose(index)]          # (T, B, C)
    V = emb_table.shape[1]
    logits = logits.reshape(T * B, V)
    tgt = targets.reshape(B * T)
    logp = jax.nn.log_softmax(logits, axis=-1)
    loss = -jnp.mean(jnp.take_along_axis(logp, tgt[:, None], axis=-1))
    return logits, loss


if __name__ == "__main__":
    B, T, V = 2, 8, 32          # (batch, seq), vocab — small shapes

    key = jax.random.PRNGKey(0)
    k_emb, k_trans, k_idx, k_tgt = jax.random.split(key, 4)

    # nn.Embedding(vocab, vocab) weights ~ N(0, 1); transition_matrix buffer
    # (registered in __init__ but unused in forward) also initialized.
    emb_table = jax.random.normal(k_emb, (V, V), dtype=jnp.float32)
    transition_matrix = jax.random.normal(k_trans, (V, V), dtype=jnp.float32)  # unused in forward

    index = jax.random.randint(k_idx, (B, T), 0, V, dtype=jnp.int32)
    targets = jax.random.randint(k_tgt, (B, T), 0, V, dtype=jnp.int32)

    # Training path (with targets).
    logits, loss = bigram_forward(index, emb_table, targets)
    jax.block_until_ready((logits, loss))

    ref_logits, ref_loss = _reference_forward(index, emb_table, targets)
    assert logits.shape == (B * T, V)
    assert jnp.allclose(logits, ref_logits, atol=2e-3), "logits mismatch"
    assert jnp.allclose(loss, ref_loss, atol=2e-3), "loss mismatch"

    # Inference path (targets is None): gather-only kernel, loss == 0.0.
    logits_inf, loss_inf = bigram_forward(index, emb_table, None)
    jax.block_until_ready((logits_inf, loss_inf))
    assert logits_inf.shape == (T, B, V)
    assert jnp.allclose(logits_inf, emb_table[jnp.transpose(index)], atol=2e-3), \
        "inference logits mismatch"
    assert float(loss_inf) == 0.0

    print("KERNEL_OK")
</pallas_src>

<mosaic_0001>
module attributes {stable_mosaic.version = 11 : i64} {
  func.func @_bigram_loss_kernel(%arg0: i32, %arg1: memref<128x1xi32, #tpu.memory_space<vmem>>, %arg2: memref<128x1xi32, #tpu.memory_space<vmem>>, %arg3: memref<32x128xf32, #tpu.memory_space<vmem>>, %arg4: memref<128x128xf32, #tpu.memory_space<vmem>>, %arg5: memref<1x1xf32, #tpu.memory_space<vmem>>) attributes {dimension_semantics = [#tpu.dimension_semantics<arbitrary>], iteration_bounds = array<i64: 1>, scalar_prefetch = 0 : i64, scratch_operands = 0 : i64, tpu.core_type = #tpu.core_type<tc>, window_params = [{transform_indices = @transform_0, window_bounds = array<i64: 128, 1>}, {transform_indices = @transform_1, window_bounds = array<i64: 128, 1>}, {pipeline_mode = #tpu.pipeline_mode<synchronous>, transform_indices = @transform_2, window_bounds = array<i64: 32, 128>}, {transform_indices = @transform_3, window_bounds = array<i64: 128, 128>}, {pipeline_mode = #tpu.pipeline_mode<synchronous>, transform_indices = @transform_4, window_bounds = array<i64: 1, 1>}]} {
    %c0_i32 = arith.constant 0 : i32
    %0 = arith.cmpi eq, %arg0, %c0_i32 : i32
    %1 = arith.extui %0 : i1 to i32
    %c0_i32_0 = arith.constant 0 : i32
    %2 = arith.cmpi ne, %1, %c0_i32_0 : i32
    scf.if %2 {
      %cst_20 = arith.constant 0.000000e+00 : f32
      %46 = vector.broadcast %cst_20 : f32 to vector<1x1xf32>
      %c0_21 = arith.constant 0 : index
      %c0_22 = arith.constant 0 : index
      %47 = vector.load %arg5[%c0_21, %c0_22] : memref<1x1xf32, #tpu.memory_space<vmem>>, vector<1x1xf32>
      tpu.vector_store %arg5[%c0_21, %c0_22], %46 {strides = array<i32>} : memref<1x1xf32, #tpu.memory_space<vmem>>, vector<1x1xf32>,
    } else {
    }
    %c0 = arith.constant 0 : index
    %c0_1 = arith.constant 0 : index
    %3 = vector.load %arg1[%c0, %c0_1] : memref<128x1xi32, #tpu.memory_space<vmem>>, vector<128x1xi32>
    %4 = tpu.iota {dimensions = array<i32: 1>} : vector<128x32xi32>
    %5 = vector.broadcast %3 : vector<128x1xi32> to vector<128x32xi32>
    %6 = arith.cmpi eq, %4, %5 : vector<128x32xi32>
    %7 = arith.extui %6 : vector<128x32xi1> to vector<128x32xi32>
    %8 = arith.sitofp %7 : vector<128x32xi32> to vector<128x32xf32>
    %c0_2 = arith.constant 0 : index
    %c0_3 = arith.constant 0 : index
    %9 = vector.load %arg3[%c0_2, %c0_3] : memref<32x128xf32, #tpu.memory_space<vmem>>, vector<32x128xf32>
    %cst = arith.constant dense<0.000000e+00> : vector<128x128xf32>
    %10 = tpu.matmul %8, %9, %cst {dimension_numbers = #tpu.dot_dimension_numbers<[1], [0], [0], [1], [0, 0, 1, 1], [], []>, precision = #tpu.contract_precision<fp32>} : vector<128x32xf32>, vector<32x128xf32>, vector<128x128xf32> -> vector<128x128xf32>
    %c0_4 = arith.constant 0 : index
    %c0_5 = arith.constant 0 : index
    %11 = vector.load %arg4[%c0_4, %c0_5] : memref<128x128xf32, #tpu.memory_space<vmem>>, vector<128x128xf32>
    tpu.vector_store %arg4[%c0_4, %c0_5], %10 {strides = array<i32>} : memref<128x128xf32, #tpu.memory_space<vmem>>, vector<128x128xf32>,
    %cst_6 = arith.constant dense<0xFF800000> : vector<128xf32>
    %12 = vector.multi_reduction <maximumf>, %10, %cst_6 [1] : vector<128x128xf32> to vector<128xf32>
    %13 = vector.shape_cast %12 : vector<128xf32> to vector<128x1xf32>
    %14 = vector.broadcast %13 : vector<128x1xf32> to vector<128x128xf32>
    %15 = arith.subf %10, %14 : vector<128x128xf32>
    %16 = math.exp %15 : vector<128x128xf32>
    %cst_7 = arith.constant dense<0.000000e+00> : vector<128xf32>
    %17 = vector.multi_reduction <add>, %16, %cst_7 [1] : vector<128x128xf32> to vector<128xf32>
    %18 = vector.shape_cast %17 : vector<128xf32> to vector<128x1xf32>
    %19 = math.log %18 : vector<128x1xf32>
    %20 = arith.addf %13, %19 : vector<128x1xf32>
    %21 = tpu.iota {dimensions = array<i32: 1>} : vector<128x128xi32>
    %c0_8 = arith.constant 0 : index
    %c0_9 = arith.constant 0 : index
    %22 = vector.load %arg2[%c0_8, %c0_9] : memref<128x1xi32, #tpu.memory_space<vmem>>, vector<128x1xi32>
    %23 = vector.broadcast %22 : vector<128x1xi32> to vector<128x128xi32>
    %24 = arith.cmpi eq, %21, %23 : vector<128x128xi32>
    %cst_10 = arith.constant 0.000000e+00 : f32
    %25 = vector.broadcast %cst_10 : f32 to vector<128x128xf32>
    %26 = arith.select %24, %10, %25 : vector<128x128xi1>, vector<128x128xf32>
    %cst_11 = arith.constant dense<0.000000e+00> : vector<128xf32>
    %27 = vector.multi_reduction <add>, %26, %cst_11 [1] : vector<128x128xf32> to vector<128xf32>
    %28 = vector.shape_cast %27 : vector<128xf32> to vector<128x1xf32>
    %c128_i32 = arith.constant 128 : i32
    %29 = arith.muli %arg0, %c128_i32 : i32
    %30 = tpu.iota {dimensions = array<i32: 0>} : vector<128x1xi32>
    %31 = vector.broadcast %29 : i32 to vector<128x1xi32>
    %32 = arith.addi %31, %30 : vector<128x1xi32>
    %c16_i32 = arith.constant 16 : i32
    %33 = vector.broadcast %c16_i32 : i32 to vector<128x1xi32>
    %34 = arith.cmpi slt, %32, %33 : vector<128x1xi32>
    %35 = arith.subf %20, %28 : vector<128x1xf32>
    %cst_12 = arith.constant 0.000000e+00 : f32
    %36 = vector.broadcast %cst_12 : f32 to vector<128x1xf32>
    %37 = arith.select %34, %35, %36 : vector<128x1xi1>, vector<128x1xf32>
    %c0_13 = arith.constant 0 : index
    %c0_14 = arith.constant 0 : index
    %38 = vector.load %arg5[%c0_13, %c0_14] : memref<1x1xf32, #tpu.memory_space<vmem>>, vector<1x1xf32>
    %cst_15 = arith.constant dense<0.000000e+00> : vector<1xf32>
    %39 = vector.multi_reduction <add>, %37, %cst_15 [0] : vector<128x1xf32> to vector<1xf32>
    %40 = vector.shape_cast %39 : vector<1xf32> to vector<1x1xf32>
    %41 = arith.addf %38, %40 : vector<1x1xf32>
    %c0_16 = arith.constant 0 : index
    %c0_17 = arith.constant 0 : index
    %42 = vector.load %arg5[%c0_16, %c0_17] : memref<1x1xf32, #tpu.memory_space<vmem>>, vector<1x1xf32>
    tpu.vector_store %arg5[%c0_16, %c0_17], %41 {strides = array<i32>} : memref<1x1xf32, #tpu.memory_space<vmem>>, vector<1x1xf32>,
    %c0_i32_18 = arith.constant 0 : i32
    %43 = arith.cmpi eq, %arg0, %c0_i32_18 : i32
    %44 = arith.extui %43 : i1 to i32
    %c0_i32_19 = arith.constant 0 : i32
    %45 = arith.cmpi ne, %44, %c0_i32_19 : i32
    scf.if %45 {
      %c0_20 = arith.constant 0 : index
      %c0_21 = arith.constant 0 : index
      %46 = vector.load %arg5[%c0_20, %c0_21] : memref<1x1xf32, #tpu.memory_space<vmem>>, vector<1x1xf32>
      %cst_22 = arith.constant 6.250000e-02 : f32
      %47 = vector.broadcast %cst_22 : f32 to vector<1x1xf32>
      %48 = arith.mulf %46, %47 : vector<1x1xf32>
      %c0_23 = arith.constant 0 : index
      %c0_24 = arith.constant 0 : index
      %49 = vector.load %arg5[%c0_23, %c0_24] : memref<1x1xf32, #tpu.memory_space<vmem>>, vector<1x1xf32>
      tpu.vector_store %arg5[%c0_23, %c0_24], %48 {strides = array<i32>} : memref<1x1xf32, #tpu.memory_space<vmem>>, vector<1x1xf32>,
    } else {
    }
    return
  }
  func.func @transform_0(%arg0: i32) -> (i32, i32) {
    %c0_i32 = arith.constant 0 : i32
    %c0_i32_0 = arith.constant 0 : i32
    return %arg0, %c0_i32 : i32, i32
  }
  func.func @transform_1(%arg0: i32) -> (i32, i32) {
    %c0_i32 = arith.constant 0 : i32
    %c0_i32_0 = arith.constant 0 : i32
    return %arg0, %c0_i32 : i32, i32
  }
  func.func @transform_2(%arg0: i32) -> (i32, i32) {
    %c0_i32 = arith.constant 0 : i32
    %c0_i32_0 = arith.constant 0 : i32
    %c0_i32_1 = arith.constant 0 : i32
    return %c0_i32, %c0_i32_0 : i32, i32
  }
  func.func @transform_3(%arg0: i32) -> (i32, i32) {
    %c0_i32 = arith.constant 0 : i32
    %c0_i32_0 = arith.constant 0 : i32
    return %arg0, %c0_i32 : i32, i32
  }
  func.func @transform_4(%arg0: i32) -> (i32, i32) {
    %c0_i32 = arith.constant 0 : i32
    %c0_i32_0 = arith.constant 0 : i32
    %c0_i32_1 = arith.constant 0 : i32
    return %c0_i32, %c0_i32_0 : i32, i32
  }
}

</mosaic_0001>

<llo_original>
// kernel: tpu_custom_call.1
$region0: #{tpu_custom_call.1}
  #allocation0 [shape = 'u32[]', space=smem, size = 0x4, offset = 0x4, fixed_abs, tag = 'smem constant byte address 0x4 - core index']
  #allocation1 [shape = 'u32[72,128]{1,0:T(1,128)}', space=vmem, size = 0x9000, scoped, tag = 'internal scratch']
  %s0 = inlined_call_operand.vmem [shape: s32[128,1], index: 0, kind: input, shape index: {}]
  %s1 = inlined_call_operand.vmem [shape: s32[128,1], index: 1, kind: input, shape index: {}]
  %s2 = inlined_call_operand.vmem [shape: f32[32,128], index: 2, kind: input, shape index: {}]
  %s3 = inlined_call_operand.hbm [shape: f32[128,128], index: 3, kind: output, shape index: {0}]
  %s4 = inlined_call_operand.hbm [shape: f32[1,1], index: 4, kind: output, shape index: {1}]
  %5 = xla_tuple %s3, %s4
  %s6 = sld [smem:[#allocation0]]
  $region38: #{tpu_custom_call.1} parent=0
    _
  %s8 = ssub.s32 1, %s6
  %s9 = scalar_select 0, %s8, %s6
  $region1: #{tpu_custom_call.1} parent=0
    #allocation2 [shape = 'u8[65536]{0}', space=vmem, size = 0x10000, scoped, tag = 'output window, operand 0, single buffered']
    #allocation3 [shape = 's32[1]{0}', space=sflag, size = 0x4, scoped, tag = 'scoped memory for tpu_custom_call.1']
    #allocation4 [shape = 'u8[512]{0}', space=vmem, size = 0x400, scoped, tag = 'output window, operand 1, single buffered']
    #allocation5 [shape = 's32[1]{0}', space=sflag, size = 0x4, scoped, tag = 'scoped memory for tpu_custom_call.1']
    %10 = vsyncpa [#allocation3], 0
    %11 = vsyncpa [#allocation5], 0
    // Predicated region
    $region2: #{tpu_custom_call.1} parent=1 // pred_check
      _
    $region3: #{tpu_custom_call.1} parent=1 // pred_check_branch
      %13 = sbr.rel (0) target = $region5
    $region4: #{tpu_custom_call.1} parent=1 // pred_region
      _
    $region5: #{tpu_custom_call.1} parent=1 // pred_fallthru
      _
    // Predicated region
    $region6: #{tpu_custom_call.1} parent=1 // pred_check
      _
    $region7: #{tpu_custom_call.1} parent=1 // pred_check_branch
      %15 = sbr.rel (0) target = $region9
    $region8: #{tpu_custom_call.1} parent=1 // pred_region
      _
    $region9: #{tpu_custom_call.1} parent=1 // pred_fallthru
      _
    // Predicated region
    $region10: #{tpu_custom_call.1} parent=1 // pred_check
      _
    $region11: #{tpu_custom_call.1} parent=1 // pred_check_branch
      %17 = sbr.rel (0) target = $region13
    $region12: #{tpu_custom_call.1} parent=1 // pred_region
      _
    $region13: #{tpu_custom_call.1} parent=1 // pred_fallthru
      _
    %p18 = scmp.eq.s32.totalorder 0, 0
    // Predicated region
    $region14: #{tpu_custom_call.1} parent=1 // pred_check
      %p19 = pneg %p18
    $region15: #{tpu_custom_call.1} parent=1 // pred_check_branch
      %21 = sbr.rel (%p19) target = $region17
    $region16: #{tpu_custom_call.1} parent=1 // pred_region
      %vm22 = vcmask 0
      %23 = vst.msk [vmem:[#allocation4] sm:$0x1] %vm22, 0.0
    $region17: #{tpu_custom_call.1} parent=1 // pred_fallthru
      _
    %v24 = vld [vmem:[%s0] sm:$0xff]
    %v25 = vld [vmem:[%s0 + $0x8] sm:$0xff]
    %v26 = vld [vmem:[%s0 + $0x10] sm:$0xff]
    %v27 = vld [vmem:[%s0 + $0x18] sm:$0xff]
    %v28 = vld [vmem:[%s0 + $0x20] sm:$0xff]
    %v29 = vld [vmem:[%s0 + $0x28] sm:$0xff]
    %v30 = vld [vmem:[%s0 + $0x30] sm:$0xff]
    %v31 = vld [vmem:[%s0 + $0x38] sm:$0xff]
    %v32 = vld [vmem:[%s0 + $0x40] sm:$0xff]
    %v33 = vld [vmem:[%s0 + $0x48] sm:$0xff]
    %v34 = vld [vmem:[%s0 + $0x50] sm:$0xff]
    %v35 = vld [vmem:[%s0 + $0x58] sm:$0xff]
    %v36 = vld [vmem:[%s0 + $0x60] sm:$0xff]
    %v37 = vld [vmem:[%s0 + $0x68] sm:$0xff]
    %v38 = vld [vmem:[%s0 + $0x70] sm:$0xff]
    %v39 = vld [vmem:[%s0 + $0x78] sm:$0xff]
    %v40 = vlaneseq
    %v41 = vand.u32 %v40, 127
    %42 = vset.pattern.permute.xlu0 0
    %43 = vperm.xlu0 %42, %v24
    %v44 = vpop.permute.xlu0 %43
    %45 = vset.pattern.permute.xlu0 0
    %46 = vperm.xlu0 %45, %v25
    %v47 = vpop.permute.xlu0 %46
    %48 = vset.pattern.permute.xlu0 0
    %49 = vperm.xlu0 %48, %v26
    %v50 = vpop.permute.xlu0 %49
    %51 = vset.pattern.permute.xlu0 0
    %52 = vperm.xlu0 %51, %v27
    %v53 = vpop.permute.xlu0 %52
    %54 = vset.pattern.permute.xlu0 0
    %55 = vperm.xlu0 %54, %v28
    %v56 = vpop.permute.xlu0 %55
    %57 = vset.pattern.permute.xlu0 0
    %58 = vperm.xlu0 %57, %v29
    %v59 = vpop.permute.xlu0 %58
    %60 = vset.pattern.permute.xlu0 0
    %61 = vperm.xlu0 %60, %v30
    %v62 = vpop.permute.xlu0 %61
    %63 = vset.pattern.permute.xlu0 0
    %64 = vperm.xlu0 %63, %v31
    %v65 = vpop.permute.xlu0 %64
    %66 = vset.pattern.permute.xlu0 0
    %67 = vperm.xlu0 %66, %v32
    %v68 = vpop.permute.xlu0 %67
    %69 = vset.pattern.permute.xlu0 0
    %70 = vperm.xlu0 %69, %v33
    %v71 = vpop.permute.xlu0 %70
    %72 = vset.pattern.permute.xlu0 0
    %73 = vperm.xlu0 %72, %v34
    %v74 = vpop.permute.xlu0 %73
    %75 = vset.pattern.permute.xlu0 0
    %76 = vperm.xlu0 %75, %v35
    %v77 = vpop.permute.xlu0 %76
    %78 = vset.pattern.permute.xlu0 0
    %79 = vperm.xlu0 %78, %v36
    %v80 = vpop.permute.xlu0 %79
    %81 = vset.pattern.permute.xlu0 0
    %82 = vperm.xlu0 %81, %v37
    %v83 = vpop.permute.xlu0 %82
    %84 = vset.pattern.permute.xlu0 0
    %85 = vperm.xlu0 %84, %v38
    %v86 = vpop.permute.xlu0 %85
    %87 = vset.pattern.permute.xlu0 0
    %88 = vperm.xlu0 %87, %v39
    %v89 = vpop.permute.xlu0 %88
    %vm90 = vcmp.eq.s32.totalorder %v41, %v44
    %vm91 = vcmp.eq.s32.totalorder %v41, %v47
    %vm92 = vcmp.eq.s32.totalorder %v41, %v50
    %vm93 = vcmp.eq.s32.totalorder %v41, %v53
    %vm94 = vcmp.eq.s32.totalorder %v41, %v56
    %vm95 = vcmp.eq.s32.totalorder %v41, %v59
    %vm96 = vcmp.eq.s32.totalorder %v41, %v62
    %vm97 = vcmp.eq.s32.totalorder %v41, %v65
    %vm98 = vcmp.eq.s32.totalorder %v41, %v68
    %vm99 = vcmp.eq.s32.totalorder %v41, %v71
    %vm100 = vcmp.eq.s32.totalorder %v41, %v74
    %vm101 = vcmp.eq.s32.totalorder %v41, %v77
    %vm102 = vcmp.eq.s32.totalorder %v41, %v80
    %vm103 = vcmp.eq.s32.totalorder %v41, %v83
    %vm104 = vcmp.eq.s32.totalorder %v41, %v86
    %vm105 = vcmp.eq.s32.totalorder %v41, %v89
    %v106 = vsel %vm90, 1, 0
    %v107 = vsel %vm91, 1, 0
    %v108 = vsel %vm92, 1, 0
    %v109 = vsel %vm93, 1, 0
    %v110 = vsel %vm94, 1, 0
    %v111 = vsel %vm95, 1, 0
    %v112 = vsel %vm96, 1, 0
    %v113 = vsel %vm97, 1, 0
    %v114 = vsel %vm98, 1, 0
    %v115 = vsel %vm99, 1, 0
    %v116 = vsel %vm100, 1, 0
    %v117 = vsel %vm101, 1, 0
    %v118 = vsel %vm102, 1, 0
    %v119 = vsel %vm103, 1, 0
    %v120 = vsel %vm104, 1, 0
    %v121 = vsel %vm105, 1, 0
    %v122 = vcvt.s32.f32 %v106
    %v123 = vcvt.s32.f32 %v107
    %v124 = vcvt.s32.f32 %v108
    %v125 = vcvt.s32.f32 %v109
    %v126 = vcvt.s32.f32 %v110
    %v127 = vcvt.s32.f32 %v111
    %v128 = vcvt.s32.f32 %v112
    %v129 = vcvt.s32.f32 %v113
    %v130 = vcvt.s32.f32 %v114
    %v131 = vcvt.s32.f32 %v115
    %v132 = vcvt.s32.f32 %v116
    %v133 = vcvt.s32.f32 %v117
    %v134 = vcvt.s32.f32 %v118
    %v135 = vcvt.s32.f32 %v119
    %v136 = vcvt.s32.f32 %v120
    %v137 = vcvt.s32.f32 %v121
    %v138 = vld [vmem:[%s2] sm:$0xff]
    %v139 = vld [vmem:[%s2 + $0x8] sm:$0xff]
    %v140 = vld [vmem:[%s2 + $0x10] sm:$0xff]
    %v141 = vld [vmem:[%s2 + $0x18] sm:$0xff]
    %vm142 = vcmask 261120
    %v144 = vsel %vm142, %v122, 0
    %v147 = vsel %vm142, %v123, 0
    %v150 = vsel %vm142, %v124, 0
    %v153 = vsel %vm142, %v125, 0
    %v156 = vsel %vm142, %v126, 0
    %v159 = vsel %vm142, %v127, 0
    %v162 = vsel %vm142, %v128, 0
    %v165 = vsel %vm142, %v129, 0
    %v168 = vsel %vm142, %v130, 0
    %v171 = vsel %vm142, %v131, 0
    %v174 = vsel %vm142, %v132, 0
    %v177 = vsel %vm142, %v133, 0
    %v180 = vsel %vm142, %v134, 0
    %v183 = vsel %vm142, %v135, 0
    %v186 = vsel %vm142, %v136, 0
    %v189 = vsel %vm142, %v137, 0
    %191 = vmatpush.msra.mxu0 0.0
    %192 = vmatpush.msra.mxu0 0.0
    %193 = vmatpush.msra.mxu0 0.0
    %194 = vmatpush.msra.mxu0 0.0
    %195 = vmatpush.msra.mxu0 0.0
    %196 = vmatpush.msra.mxu0 0.0
    %197 = vmatpush.msra.mxu0 0.0
    %198 = vmatpush.msra.mxu0 0.0
    %199 = vmatpush.msra.mxu0 0.0
    %200 = vmatpush.msra.mxu0 0.0
    %201 = vmatpush.msra.mxu0 0.0
    %202 = vmatpush.msra.mxu0 0.0
    %v203 = vand.u32 %v141, 4294901760
    %204 = vmatpush.msra.mxu0 %v203
    %v205 = vand.u32 %v140, 4294901760
    %206 = vmatpush.msra.mxu0 %v205
    %v207 = vand.u32 %v139, 4294901760
    %208 = vmatpush.msra.mxu0 %v207
    %v209 = vand.u32 %v138, 4294901760
    %210 = vmatpush.msra.mxu0 %v209
    %v211 = vand.u32 %v144, 4294901760
    %v212 = vsub.f32 %v144, %v211
    %v213 = vand.u32 %v212, 4294901760
    %v214 = vsub.f32 %v212, %v213
    %v215 = vand.u32 %v214, 4294901760
    %216 = vmatmul.f32.gmra.mxu0 %v215
    %v217 = vpop.f32.mrf.mxu0
    %v218 = vadd.f32 0.0, %v217
    %v219 = vand.u32 %v147, 4294901760
    %v220 = vsub.f32 %v147, %v219
    %v221 = vand.u32 %v220, 4294901760
    %v222 = vsub.f32 %v220, %v221
    %v223 = vand.u32 %v222, 4294901760
    %224 = vmatmul.f32.gmra.mxu0 %v223
    %v225 = vpop.f32.mrf.mxu0
    %v226 = vadd.f32 0.0, %v225
    %v227 = vand.u32 %v150, 4294901760
    %v228 = vsub.f32 %v150, %v227
    %v229 = vand.u32 %v228, 4294901760
    %v230 = vsub.f32 %v228, %v229
    %v231 = vand.u32 %v230, 4294901760
    %232 = vmatmul.f32.gmra.mxu0 %v231
    %v233 = vpop.f32.mrf.mxu0
    %v234 = vadd.f32 0.0, %v233
    %v235 = vand.u32 %v153, 4294901760
    %v236 = vsub.f32 %v153, %v235
    %v237 = vand.u32 %v236, 4294901760
    %v238 = vsub.f32 %v236, %v237
    %v239 = vand.u32 %v238, 4294901760
    %240 = vmatmul.f32.gmra.mxu0 %v239
    %v241 = vpop.f32.mrf.mxu0
    %v242 = vadd.f32 0.0, %v241
    %v243 = vand.u32 %v156, 4294901760
    %v244 = vsub.f32 %v156, %v243
    %v245 = vand.u32 %v244, 4294901760
    %v246 = vsub.f32 %v244, %v245
    %v247 = vand.u32 %v246, 4294901760
    %248 = vmatmul.f32.gmra.mxu0 %v247
    %v249 = vpop.f32.mrf.mxu0
    %v250 = vadd.f32 0.0, %v249
    %v251 = vand.u32 %v159, 4294901760
    %v252 = vsub.f32 %v159, %v251
    %v253 = vand.u32 %v252, 4294901760
    %v254 = vsub.f32 %v252, %v253
    %v255 = vand.u32 %v254, 4294901760
    %256 = vmatmul.f32.gmra.mxu0 %v255
    %v257 = vpop.f32.mrf.mxu0
    %v258 = vadd.f32 0.0, %v257
    %v259 = vand.u32 %v162, 4294901760
    %v260 = vsub.f32 %v162, %v259
    %v261 = vand.u32 %v260, 4294901760
    %v262 = vsub.f32 %v260, %v261
    %v263 = vand.u32 %v262, 4294901760
    %264 = vmatmul.f32.gmra.mxu0 %v263
    %v265 = vpop.f32.mrf.mxu0
    %v266 = vadd.f32 0.0, %v265
    %v267 = vand.u32 %v165, 4294901760
    %v268 = vsub.f32 %v165, %v267
    %v269 = vand.u32 %v268, 4294901760
    %v270 = vsub.f32 %v268, %v269
    %v271 = vand.u32 %v270, 4294901760
    %272 = vmatmul.f32.gmra.mxu0 %v271
    %v273 = vpop.f32.mrf.mxu0
    %v274 = vadd.f32 0.0, %v273
    %v275 = vand.u32 %v168, 4294901760
    %v276 = vsub.f32 %v168, %v275
    %v277 = vand.u32 %v276, 4294901760
    %v278 = vsub.f32 %v276, %v277
    %v279 = vand.u32 %v278, 4294901760
    %280 = vmatmul.f32.gmra.mxu0 %v279
    %v281 = vpop.f32.mrf.mxu0
    %v282 = vadd.f32 0.0, %v281
    %v283 = vand.u32 %v171, 4294901760
    %v284 = vsub.f32 %v171, %v283
    %v285 = vand.u32 %v284, 4294901760
    %v286 = vsub.f32 %v284, %v285
    %v287 = vand.u32 %v286, 4294901760
    %288 = vmatmul.f32.gmra.mxu0 %v287
    %v289 = vpop.f32.mrf.mxu0
    %v290 = vadd.f32 0.0, %v289
    %v291 = vand.u32 %v174, 4294901760
    %v292 = vsub.f32 %v174, %v291
    %v293 = vand.u32 %v292, 4294901760
    %v294 = vsub.f32 %v292, %v293
    %v295 = vand.u32 %v294, 4294901760
    %296 = vmatmul.f32.gmra.mxu0 %v295
    %v297 = vpop.f32.mrf.mxu0
    %v298 = vadd.f32 0.0, %v297
    %v299 = vand.u32 %v177, 4294901760
    %v300 = vsub.f32 %v177, %v299
    %v301 = vand.u32 %v300, 4294901760
    %v302 = vsub.f32 %v300, %v301
    %v303 = vand.u32 %v302, 4294901760
    %304 = vmatmul.f32.gmra.mxu0 %v303
    %v305 = vpop.f32.mrf.mxu0
    %v306 = vadd.f32 0.0, %v305
    %v307 = vand.u32 %v180, 4294901760
    %v308 = vsub.f32 %v180, %v307
    %v309 = vand.u32 %v308, 4294901760
    %v310 = vsub.f32 %v308, %v309
    %v311 = vand.u32 %v310, 4294901760
    %312 = vmatmul.f32.gmra.mxu0 %v311
    %v313 = vpop.f32.mrf.mxu0
    %v314 = vadd.f32 0.0, %v313
    %v315 = vand.u32 %v183, 4294901760
    %v316 = vsub.f32 %v183, %v315
    %v317 = vand.u32 %v316, 4294901760
    %v318 = vsub.f32 %v316, %v317
    %v319 = vand.u32 %v318, 4294901760
    %320 = vmatmul.f32.gmra.mxu0 %v319
    %v321 = vpop.f32.mrf.mxu0
    %v322 = vadd.f32 0.0, %v321
    %v323 = vand.u32 %v186, 4294901760
    %v324 = vsub.f32 %v186, %v323
    %v325 = vand.u32 %v324, 4294901760
    %v326 = vsub.f32 %v324, %v325
    %v327 = vand.u32 %v326, 4294901760
    %328 = vmatmul.f32.gmra.mxu0 %v327
    %v329 = vpop.f32.mrf.mxu0
    %v330 = vadd.f32 0.0, %v329
    %v331 = vand.u32 %v189, 4294901760
    %v332 = vsub.f32 %v189, %v331
    %v333 = vand.u32 %v332, 4294901760
    %v334 = vsub.f32 %v332, %v333
    %v335 = vand.u32 %v334, 4294901760
    %336 = vmatmul.f32.gmra.mxu0 %v335
    %v337 = vpop.f32.mrf.mxu0
    %v338 = vadd.f32 0.0, %v337
    %339 = vdwg.mxu0
    %340 = vmatpush.msra.mxu0 0.0
    %341 = vmatpush.msra.mxu0 0.0
    %342 = vmatpush.msra.mxu0 0.0
    %343 = vmatpush.msra.mxu0 0.0
    %344 = vmatpush.msra.mxu0 0.0
    %345 = vmatpush.msra.mxu0 0.0
    %346 = vmatpush.msra.mxu0 0.0
    %347 = vmatpush.msra.mxu0 0.0
    %348 = vmatpush.msra.mxu0 0.0
    %349 = vmatpush.msra.mxu0 0.0
    %350 = vmatpush.msra.mxu0 0.0
    %351 = vmatpush.msra.mxu0 0.0
    %v352 = vand.u32 %v141, 4294901760
    %v353 = vsub.f32 %v141, %v352
    %v354 = vand.u32 %v353, 4294901760
    %v355 = vsub.f32 %v353, %v354
    %v356 = vand.u32 %v355, 4294901760
    %357 = vmatpush.msra.mxu0 %v356
    %v358 = vand.u32 %v140, 4294901760
    %v359 = vsub.f32 %v140, %v358
    %v360 = vand.u32 %v359, 4294901760
    %v361 = vsub.f32 %v359, %v360
    %v362 = vand.u32 %v361, 4294901760
    %363 = vmatpush.msra.mxu0 %v362
    %v364 = vand.u32 %v139, 4294901760
    %v365 = vsub.f32 %v139, %v364
    %v366 = vand.u32 %v365, 4294901760
    %v367 = vsub.f32 %v365, %v366
    %v368 = vand.u32 %v367, 4294901760
    %369 = vmatpush.msra.mxu0 %v368
    %v370 = vand.u32 %v138, 4294901760
    %v371 = vsub.f32 %v138, %v370
    %v372 = vand.u32 %v371, 4294901760
    %v373 = vsub.f32 %v371, %v372
    %v374 = vand.u32 %v373, 4294901760
    %375 = vmatpush.msra.mxu0 %v374
    %v376 = vand.u32 %v144, 4294901760
    %377 = vmatmul.f32.gmra.mxu0 %v376
    %v378 = vpop.f32.mrf.mxu0
    %v379 = vadd.f32 %v218, %v378
    %v380 = vand.u32 %v147, 4294901760
    %381 = vmatmul.f32.gmra.mxu0 %v380
    %v382 = vpop.f32.mrf.mxu0
    %v383 = vadd.f32 %v226, %v382
    %v384 = vand.u32 %v150, 4294901760
    %385 = vmatmul.f32.gmra.mxu0 %v384
    %v386 = vpop.f32.mrf.mxu0
    %v387 = vadd.f32 %v234, %v386
    %v388 = vand.u32 %v153, 4294901760
    %389 = vmatmul.f32.gmra.mxu0 %v388
    %v390 = vpop.f32.mrf.mxu0
    %v391 = vadd.f32 %v242, %v390
    %v392 = vand.u32 %v156, 4294901760
    %393 = vmatmul.f32.gmra.mxu0 %v392
    %v394 = vpop.f32.mrf.mxu0
    %v395 = vadd.f32 %v250, %v394
    %v396 = vand.u32 %v159, 4294901760
    %397 = vmatmul.f32.gmra.mxu0 %v396
    %v398 = vpop.f32.mrf.mxu0
    %v399 = vadd.f32 %v258, %v398
    %v400 = vand.u32 %v162, 4294901760
    %401 = vmatmul.f32.gmra.mxu0 %v400
    %v402 = vpop.f32.mrf.mxu0
    %v403 = vadd.f32 %v266, %v402
    %v404 = vand.u32 %v165, 4294901760
    %405 = vmatmul.f32.gmra.mxu0 %v404
    %v406 = vpop.f32.mrf.mxu0
    %v407 = vadd.f32 %v274, %v406
    %v408 = vand.u32 %v168, 4294901760
    %409 = vmatmul.f32.gmra.mxu0 %v408
    %v410 = vpop.f32.mrf.mxu0
    %v411 = vadd.f32 %v282, %v410
    %v412 = vand.u32 %v171, 4294901760
    %413 = vmatmul.f32.gmra.mxu0 %v412
    %v414 = vpop.f32.mrf.mxu0
    %v415 = vadd.f32 %v290, %v414
    %v416 = vand.u32 %v174, 4294901760
    %417 = vmatmul.f32.gmra.mxu0 %v416
    %v418 = vpop.f32.mrf.mxu0
    %v419 = vadd.f32 %v298, %v418
    %v420 = vand.u32 %v177, 4294901760
    %421 = vmatmul.f32.gmra.mxu0 %v420
    %v422 = vpop.f32.mrf.mxu0
    %v423 = vadd.f32 %v306, %v422
    %v424 = vand.u32 %v180, 4294901760
    %425 = vmatmul.f32.gmra.mxu0 %v424
    %v426 = vpop.f32.mrf.mxu0
    %v427 = vadd.f32 %v314, %v426
    %v428 = vand.u32 %v183, 4294901760
    %429 = vmatmul.f32.gmra.mxu0 %v428
    %v430 = vpop.f32.mrf.mxu0
    %v431 = vadd.f32 %v322, %v430
    %v432 = vand.u32 %v186, 4294901760
    %433 = vmatmul.f32.gmra.mxu0 %v432
    %v434 = vpop.f32.mrf.mxu0
    %v435 = vadd.f32 %v330, %v434
    %v436 = vand.u32 %v189, 4294901760
    %437 = vmatmul.f32.gmra.mxu0 %v436
    %v438 = vpop.f32.mrf.mxu0
    %v439 = vadd.f32 %v338, %v438
    %440 = vdwg.mxu0
    %441 = vmatpush.msra.mxu0 0.0
    %442 = vmatpush.msra.mxu0 0.0
    %443 = vmatpush.msra.mxu0 0.0
    %444 = vmatpush.msra.mxu0 0.0
    %445 = vmatpush.msra.mxu0 0.0
    %446 = vmatpush.msra.mxu0 0.0
    %447 = vmatpush.msra.mxu0 0.0
    %448 = vmatpush.msra.mxu0 0.0
    %449 = vmatpush.msra.mxu0 0.0
    %450 = vmatpush.msra.mxu0 0.0
    %451 = vmatpush.msra.mxu0 0.0
    %452 = vmatpush.msra.mxu0 0.0
    %v453 = vand.u32 %v141, 4294901760
    %v454 = vsub.f32 %v141, %v453
    %455 = vmatpush.msra.mxu0 %v454
    %v456 = vand.u32 %v140, 4294901760
    %v457 = vsub.f32 %v140, %v456
    %458 = vmatpush.msra.mxu0 %v457
    %v459 = vand.u32 %v139, 4294901760
    %v460 = vsub.f32 %v139, %v459
    %461 = vmatpush.msra.mxu0 %v460
    %v462 = vand.u32 %v138, 4294901760
    %v463 = vsub.f32 %v138, %v462
    %464 = vmatpush.msra.mxu0 %v463
    %v465 = vand.u32 %v144, 4294901760
    %v466 = vsub.f32 %v144, %v465
    %467 = vmatmul.f32.gmra.mxu0 %v466
    %v468 = vpop.f32.mrf.mxu0
    %v469 = vadd.f32 %v379, %v468
    %v470 = vand.u32 %v147, 4294901760
    %v471 = vsub.f32 %v147, %v470
    %472 = vmatmul.f32.gmra.mxu0 %v471
    %v473 = vpop.f32.mrf.mxu0
    %v474 = vadd.f32 %v383, %v473
    %v475 = vand.u32 %v150, 4294901760
    %v476 = vsub.f32 %v150, %v475
    %477 = vmatmul.f32.gmra.mxu0 %v476
    %v478 = vpop.f32.mrf.mxu0
    %v479 = vadd.f32 %v387, %v478
    %v480 = vand.u32 %v153, 4294901760
    %v481 = vsub.f32 %v153, %v480
    %482 = vmatmul.f32.gmra.mxu0 %v481
    %v483 = vpop.f32.mrf.mxu0
    %v484 = vadd.f32 %v391, %v483
    %v485 = vand.u32 %v156, 4294901760
    %v486 = vsub.f32 %v156, %v485
    %487 = vmatmul.f32.gmra.mxu0 %v486
    %v488 = vpop.f32.mrf.mxu0
    %v489 = vadd.f32 %v395, %v488
    %v490 = vand.u32 %v159, 4294901760
    %v491 = vsub.f32 %v159, %v490
    %492 = vmatmul.f32.gmra.mxu0 %v491
    %v493 = vpop.f32.mrf.mxu0
    %v494 = vadd.f32 %v399, %v493
    %v495 = vand.u32 %v162, 4294901760
    %v496 = vsub.f32 %v162, %v495
    %497 = vmatmul.f32.gmra.mxu0 %v496
    %v498 = vpop.f32.mrf.mxu0
    %v499 = vadd.f32 %v403, %v498
    %v500 = vand.u32 %v165, 4294901760
    %v501 = vsub.f32 %v165, %v500
    %502 = vmatmul.f32.gmra.mxu0 %v501
    %v503 = vpop.f32.mrf.mxu0
    %v504 = vadd.f32 %v407, %v503
    %v505 = vand.u32 %v168, 4294901760
    %v506 = vsub.f32 %v168, %v505
    %507 = vmatmul.f32.gmra.mxu0 %v506
    %v508 = vpop.f32.mrf.mxu0
    %v509 = vadd.f32 %v411, %v508
    %v510 = vand.u32 %v171, 4294901760
    %v511 = vsub.f32 %v171, %v510
    %512 = vmatmul.f32.gmra.mxu0 %v511
    %v513 = vpop.f32.mrf.mxu0
    %v514 = vadd.f32 %v415, %v513
    %v515 = vand.u32 %v174, 4294901760
    %v516 = vsub.f32 %v174, %v515
    %517 = vmatmul.f32.gmra.mxu0 %v516
    %v518 = vpop.f32.mrf.mxu0
    %v519 = vadd.f32 %v419, %v518
    %v520 = vand.u32 %v177, 4294901760
    %v521 = vsub.f32 %v177, %v520
    %522 = vmatmul.f32.gmra.mxu0 %v521
    %v523 = vpop.f32.mrf.mxu0
    %v524 = vadd.f32 %v423, %v523
    %v525 = vand.u32 %v180, 4294901760
    %v526 = vsub.f32 %v180, %v525
    %527 = vmatmul.f32.gmra.mxu0 %v526
    %v528 = vpop.f32.mrf.mxu0
    %v529 = vadd.f32 %v427, %v528
    %v530 = vand.u32 %v183, 4294901760
    %v531 = vsub.f32 %v183, %v530
    %532 = vmatmul.f32.gmra.mxu0 %v531
    %v533 = vpop.f32.mrf.mxu0
    %v534 = vadd.f32 %v431, %v533
    %v535 = vand.u32 %v186, 4294901760
    %v536 = vsub.f32 %v186, %v535
    %537 = vmatmul.f32.gmra.mxu0 %v536
    %v538 = vpop.f32.mrf.mxu0
    %v539 = vadd.f32 %v435, %v538
    %v540 = vand.u32 %v189, 4294901760
    %v541 = vsub.f32 %v189, %v540
    %542 = vmatmul.f32.gmra.mxu0 %v541
    %v543 = vpop.f32.mrf.mxu0
    %v544 = vadd.f32 %v439, %v543
    %545 = vdwg.mxu0
    %546 = vmatpush.msra.mxu0 0.0
    %547 = vmatpush.msra.mxu0 0.0
    %548 = vmatpush.msra.mxu0 0.0
    %549 = vmatpush.msra.mxu0 0.0
    %550 = vmatpush.msra.mxu0 0.0
    %551 = vmatpush.msra.mxu0 0.0
    %552 = vmatpush.msra.mxu0 0.0
    %553 = vmatpush.msra.mxu0 0.0
    %554 = vmatpush.msra.mxu0 0.0
    %555 = vmatpush.msra.mxu0 0.0
    %556 = vmatpush.msra.mxu0 0.0
    %557 = vmatpush.msra.mxu0 0.0
    %v558 = vand.u32 %v141, 4294901760
    %559 = vmatpush.msra.mxu0 %v558
    %v560 = vand.u32 %v140, 4294901760
    %561 = vmatpush.msra.mxu0 %v560
    %v562 = vand.u32 %v139, 4294901760
    %563 = vmatpush.msra.mxu0 %v562
    %v564 = vand.u32 %v138, 4294901760
    %565 = vmatpush.msra.mxu0 %v564
    %v566 = vand.u32 %v144, 4294901760
    %v567 = vsub.f32 %v144, %v566
    %v568 = vand.u32 %v567, 4294901760
    %569 = vmatmul.f32.gmra.mxu0 %v568
    %v570 = vpop.f32.mrf.mxu0
    %v571 = vadd.f32 %v469, %v570
    %v572 = vand.u32 %v147, 4294901760
    %v573 = vsub.f32 %v147, %v572
    %v574 = vand.u32 %v573, 4294901760
    %575 = vmatmul.f32.gmra.mxu0 %v574
    %v576 = vpop.f32.mrf.mxu0
    %v577 = vadd.f32 %v474, %v576
    %v578 = vand.u32 %v150, 4294901760
    %v579 = vsub.f32 %v150, %v578
    %v580 = vand.u32 %v579, 4294901760
    %581 = vmatmul.f32.gmra.mxu0 %v580
    %v582 = vpop.f32.mrf.mxu0
    %v583 = vadd.f32 %v479, %v582
    %v584 = vand.u32 %v153, 4294901760
    %v585 = vsub.f32 %v153, %v584
    %v586 = vand.u32 %v585, 4294901760
    %587 = vmatmul.f32.gmra.mxu0 %v586
    %v588 = vpop.f32.mrf.mxu0
    %v589 = vadd.f32 %v484, %v588
    %v590 = vand.u32 %v156, 4294901760
    %v591 = vsub.f32 %v156, %v590
    %v592 = vand.u32 %v591, 4294901760
    %593 = vmatmul.f32.gmra.mxu0 %v592
    %v594 = vpop.f32.mrf.mxu0
    %v595 = vadd.f32 %v489, %v594
    %v596 = vand.u32 %v159, 4294901760
    %v597 = vsub.f32 %v159, %v596
    %v598 = vand.u32 %v597, 4294901760
    %599 = vmatmul.f32.gmra.mxu0 %v598
    %v600 = vpop.f32.mrf.mxu0
    %v601 = vadd.f32 %v494, %v600
    %v602 = vand.u32 %v162, 4294901760
    %v603 = vsub.f32 %v162, %v602
    %v604 = vand.u32 %v603, 4294901760
    %605 = vmatmul.f32.gmra.mxu0 %v604
    %v606 = vpop.f32.mrf.mxu0
    %v607 = vadd.f32 %v499, %v606
    %v608 = vand.u32 %v165, 4294901760
    %v609 = vsub.f32 %v165, %v608
    %v610 = vand.u32 %v609, 4294901760
    %611 = vmatmul.f32.gmra.mxu0 %v610
    %v612 = vpop.f32.mrf.mxu0
    %v613 = vadd.f32 %v504, %v612
    %v614 = vand.u32 %v168, 4294901760
    %v615 = vsub.f32 %v168, %v614
    %v616 = vand.u32 %v615, 4294901760
    %617 = vmatmul.f32.gmra.mxu0 %v616
    %v618 = vpop.f32.mrf.mxu0
    %v619 = vadd.f32 %v509, %v618
    %v620 = vand.u32 %v171, 4294901760
    %v621 = vsub.f32 %v171, %v620
    %v622 = vand.u32 %v621, 4294901760
    %623 = vmatmul.f32.gmra.mxu0 %v622
    %v624 = vpop.f32.mrf.mxu0
    %v625 = vadd.f32 %v514, %v624
    %v626 = vand.u32 %v174, 4294901760
    %v627 = vsub.f32 %v174, %v626
    %v628 = vand.u32 %v627, 4294901760
    %629 = vmatmul.f32.gmra.mxu0 %v628
    %v630 = vpop.f32.mrf.mxu0
    %v631 = vadd.f32 %v519, %v630
    %v632 = vand.u32 %v177, 4294901760
    %v633 = vsub.f32 %v177, %v632
    %v634 = vand.u32 %v633, 4294901760
    %635 = vmatmul.f32.gmra.mxu0 %v634
    %v636 = vpop.f32.mrf.mxu0
    %v637 = vadd.f32 %v524, %v636
    %v638 = vand.u32 %v180, 4294901760
    %v639 = vsub.f32 %v180, %v638
    %v640 = vand.u32 %v639, 4294901760
    %641 = vmatmul.f32.gmra.mxu0 %v640
    %v642 = vpop.f32.mrf.mxu0
    %v643 = vadd.f32 %v529, %v642
    %v644 = vand.u32 %v183, 4294901760
    %v645 = vsub.f32 %v183, %v644
    %v646 = vand.u32 %v645, 4294901760
    %647 = vmatmul.f32.gmra.mxu0 %v646
    %v648 = vpop.f32.mrf.mxu0
    %v649 = vadd.f32 %v534, %v648
    %v650 = vand.u32 %v186, 4294901760
    %v651 = vsub.f32 %v186, %v650
    %v652 = vand.u32 %v651, 4294901760
    %653 = vmatmul.f32.gmra.mxu0 %v652
    %v654 = vpop.f32.mrf.mxu0
    %v655 = vadd.f32 %v539, %v654
    %v656 = vand.u32 %v189, 4294901760
    %v657 = vsub.f32 %v189, %v656
    %v658 = vand.u32 %v657, 4294901760
    %659 = vmatmul.f32.gmra.mxu0 %v658
    %v660 = vpop.f32.mrf.mxu0
    %v661 = vadd.f32 %v544, %v660
    %662 = vdwg.mxu0
    %663 = vmatpush.msra.mxu0 0.0
    %664 = vmatpush.msra.mxu0 0.0
    %665 = vmatpush.msra.mxu0 0.0
    %666 = vmatpush.msra.mxu0 0.0
    %667 = vmatpush.msra.mxu0 0.0
    %668 = vmatpush.msra.mxu0 0.0
    %669 = vmatpush.msra.mxu0 0.0
    %670 = vmatpush.msra.mxu0 0.0
    %671 = vmatpush.msra.mxu0 0.0
    %672 = vmatpush.msra.mxu0 0.0
    %673 = vmatpush.msra.mxu0 0.0
    %674 = vmatpush.msra.mxu0 0.0
    %v675 = vand.u32 %v141, 4294901760
    %v676 = vsub.f32 %v141, %v675
    %v677 = vand.u32 %v676, 4294901760
    %678 = vmatpush.msra.mxu0 %v677
    %v679 = vand.u32 %v140, 4294901760
    %v680 = vsub.f32 %v140, %v679
    %v681 = vand.u32 %v680, 4294901760
    %682 = vmatpush.msra.mxu0 %v681
    %v683 = vand.u32 %v139, 4294901760
    %v684 = vsub.f32 %v139, %v683
    %v685 = vand.u32 %v684, 4294901760
    %686 = vmatpush.msra.mxu0 %v685
    %v687 = vand.u32 %v138, 4294901760
    %v688 = vsub.f32 %v138, %v687
    %v689 = vand.u32 %v688, 4294901760
    %690 = vmatpush.msra.mxu0 %v689
    %v691 = vand.u32 %v144, 4294901760
    %692 = vmatmul.f32.gmra.mxu0 %v691
    %v693 = vpop.f32.mrf.mxu0
    %v694 = vadd.f32 %v571, %v693
    %v695 = vand.u32 %v147, 4294901760
    %696 = vmatmul.f32.gmra.mxu0 %v695
    %v697 = vpop.f32.mrf.mxu0
    %v698 = vadd.f32 %v577, %v697
    %v699 = vand.u32 %v150, 4294901760
    %700 = vmatmul.f32.gmra.mxu0 %v699
    %v701 = vpop.f32.mrf.mxu0
    %v702 = vadd.f32 %v583, %v701
    %v703 = vand.u32 %v153, 4294901760
    %704 = vmatmul.f32.gmra.mxu0 %v703
    %v705 = vpop.f32.mrf.mxu0
    %v706 = vadd.f32 %v589, %v705
    %v707 = vand.u32 %v156, 4294901760
    %708 = vmatmul.f32.gmra.mxu0 %v707
    %v709 = vpop.f32.mrf.mxu0
    %v710 = vadd.f32 %v595, %v709
    %v711 = vand.u32 %v159, 4294901760
    %712 = vmatmul.f32.gmra.mxu0 %v711
    %v713 = vpop.f32.mrf.mxu0
    %v714 = vadd.f32 %v601, %v713
    %v715 = vand.u32 %v162, 4294901760
    %716 = vmatmul.f32.gmra.mxu0 %v715
    %v717 = vpop.f32.mrf.mxu0
    %v718 = vadd.f32 %v607, %v717
    %v719 = vand.u32 %v165, 4294901760
    %720 = vmatmul.f32.gmra.mxu0 %v719
    %v721 = vpop.f32.mrf.mxu0
    %v722 = vadd.f32 %v613, %v721
    %v723 = vand.u32 %v168, 4294901760
    %724 = vmatmul.f32.gmra.mxu0 %v723
    %v725 = vpop.f32.mrf.mxu0
    %v726 = vadd.f32 %v619, %v725
    %v727 = vand.u32 %v171, 4294901760
    %728 = vmatmul.f32.gmra.mxu0 %v727
    %v729 = vpop.f32.mrf.mxu0
    %v730 = vadd.f32 %v625, %v729
    %v731 = vand.u32 %v174, 4294901760
    %732 = vmatmul.f32.gmra.mxu0 %v731
    %v733 = vpop.f32.mrf.mxu0
    %v734 = vadd.f32 %v631, %v733
    %v735 = vand.u32 %v177, 4294901760
    %736 = vmatmul.f32.gmra.mxu0 %v735
    %v737 = vpop.f32.mrf.mxu0
    %v738 = vadd.f32 %v637, %v737
    %v739 = vand.u32 %v180, 4294901760
    %740 = vmatmul.f32.gmra.mxu0 %v739
    %v741 = vpop.f32.mrf.mxu0
    %v742 = vadd.f32 %v643, %v741
    %v743 = vand.u32 %v183, 4294901760
    %744 = vmatmul.f32.gmra.mxu0 %v743
    %v745 = vpop.f32.mrf.mxu0
    %v746 = vadd.f32 %v649, %v745
    %v747 = vand.u32 %v186, 4294901760
    %748 = vmatmul.f32.gmra.mxu0 %v747
    %v749 = vpop.f32.mrf.mxu0
    %v750 = vadd.f32 %v655, %v749
    %v751 = vand.u32 %v189, 4294901760
    %752 = vmatmul.f32.gmra.mxu0 %v751
    %v753 = vpop.f32.mrf.mxu0
    %v754 = vadd.f32 %v661, %v753
    %755 = vdwg.mxu0
    %756 = vmatpush.msra.mxu0 0.0
    %757 = vmatpush.msra.mxu0 0.0
    %758 = vmatpush.msra.mxu0 0.0
    %759 = vmatpush.msra.mxu0 0.0
    %760 = vmatpush.msra.mxu0 0.0
    %761 = vmatpush.msra.mxu0 0.0
    %762 = vmatpush.msra.mxu0 0.0
    %763 = vmatpush.msra.mxu0 0.0
    %764 = vmatpush.msra.mxu0 0.0
    %765 = vmatpush.msra.mxu0 0.0
    %766 = vmatpush.msra.mxu0 0.0
    %767 = vmatpush.msra.mxu0 0.0
    %v768 = vand.u32 %v141, 4294901760
    %769 = vmatpush.msra.mxu0 %v768
    %v770 = vand.u32 %v140, 4294901760
    %771 = vmatpush.msra.mxu0 %v770
    %v772 = vand.u32 %v139, 4294901760
    %773 = vmatpush.msra.mxu0 %v772
    %v774 = vand.u32 %v138, 4294901760
    %775 = vmatpush.msra.mxu0 %v774
    %v776 = vand.u32 %v144, 4294901760
    %777 = vmatmul.f32.gmra.mxu0 %v776
    %v778 = vpop.f32.mrf.mxu0
    %v779 = vadd.f32 %v694, %v778
    %v780 = vand.u32 %v147, 4294901760
    %781 = vmatmul.f32.gmra.mxu0 %v780
    %v782 = vpop.f32.mrf.mxu0
    %v783 = vadd.f32 %v698, %v782
    %v784 = vand.u32 %v150, 4294901760
    %785 = vmatmul.f32.gmra.mxu0 %v784
    %v786 = vpop.f32.mrf.mxu0
    %v787 = vadd.f32 %v702, %v786
    %v788 = vand.u32 %v153, 4294901760
    %789 = vmatmul.f32.gmra.mxu0 %v788
    %v790 = vpop.f32.mrf.mxu0
    %v791 = vadd.f32 %v706, %v790
    %v792 = vand.u32 %v156, 4294901760
    %793 = vmatmul.f32.gmra.mxu0 %v792
    %v794 = vpop.f32.mrf.mxu0
    %v795 = vadd.f32 %v710, %v794
    %v796 = vand.u32 %v159, 4294901760
    %797 = vmatmul.f32.gmra.mxu0 %v796
    %v798 = vpop.f32.mrf.mxu0
    %v799 = vadd.f32 %v714, %v798
    %v800 = vand.u32 %v162, 4294901760
    %801 = vmatmul.f32.gmra.mxu0 %v800
    %v802 = vpop.f32.mrf.mxu0
    %v803 = vadd.f32 %v718, %v802
    %v804 = vand.u32 %v165, 4294901760
    %805 = vmatmul.f32.gmra.mxu0 %v804
    %v806 = vpop.f32.mrf.mxu0
    %v807 = vadd.f32 %v722, %v806
    %v808 = vand.u32 %v168, 4294901760
    %809 = vmatmul.f32.gmra.mxu0 %v808
    %v810 = vpop.f32.mrf.mxu0
    %v811 = vadd.f32 %v726, %v810
    %v812 = vand.u32 %v171, 4294901760
    %813 = vmatmul.f32.gmra.mxu0 %v812
    %v814 = vpop.f32.mrf.mxu0
    %v815 = vadd.f32 %v730, %v814
    %v816 = vand.u32 %v174, 4294901760
    %817 = vmatmul.f32.gmra.mxu0 %v816
    %v818 = vpop.f32.mrf.mxu0
    %v819 = vadd.f32 %v734, %v818
    %v820 = vand.u32 %v177, 4294901760
    %821 = vmatmul.f32.gmra.mxu0 %v820
    %v822 = vpop.f32.mrf.mxu0
    %v823 = vadd.f32 %v738, %v822
    %v824 = vand.u32 %v180, 4294901760
    %825 = vmatmul.f32.gmra.mxu0 %v824
    %v826 = vpop.f32.mrf.mxu0
    %v827 = vadd.f32 %v742, %v826
    %v828 = vand.u32 %v183, 4294901760
    %829 = vmatmul.f32.gmra.mxu0 %v828
    %v830 = vpop.f32.mrf.mxu0
    %v831 = vadd.f32 %v746, %v830
    %v832 = vand.u32 %v186, 4294901760
    %833 = vmatmul.f32.gmra.mxu0 %v832
    %v834 = vpop.f32.mrf.mxu0
    %v835 = vadd.f32 %v750, %v834
    %v836 = vand.u32 %v189, 4294901760
    %837 = vmatmul.f32.gmra.mxu0 %v836
    %v838 = vpop.f32.mrf.mxu0
    %v839 = vadd.f32 %v754, %v838
    %840 = vdwg.mxu0
    %841 = vst [vmem:[#allocation2] sm:$0xff] %v779
    %842 = vst [vmem:[#allocation2 + $0x8] sm:$0xff] %v783
    %843 = vst [vmem:[#allocation2 + $0x10] sm:$0xff] %v787
    %844 = vst [vmem:[#allocation2 + $0x18] sm:$0xff] %v791
    %845 = vst [vmem:[#allocation2 + $0x20] sm:$0xff] %v795
    %846 = vst [vmem:[#allocation2 + $0x28] sm:$0xff] %v799
    %847 = vst [vmem:[#allocation2 + $0x30] sm:$0xff] %v803
    %848 = vst [vmem:[#allocation2 + $0x38] sm:$0xff] %v807
    %849 = vst [vmem:[#allocation2 + $0x40] sm:$0xff] %v811
    %850 = vst [vmem:[#allocation2 + $0x48] sm:$0xff] %v815
    %851 = vst [vmem:[#allocation2 + $0x50] sm:$0xff] %v819
    %852 = vst [vmem:[#allocation2 + $0x58] sm:$0xff] %v823
    %853 = vst [vmem:[#allocation2 + $0x60] sm:$0xff] %v827
    %854 = vst [vmem:[#allocation2 + $0x68] sm:$0xff] %v831
    %855 = vst [vmem:[#allocation2 + $0x70] sm:$0xff] %v835
    %856 = vst [vmem:[#allocation2 + $0x78] sm:$0xff] %v839
    %857 = vmax.xlane.f32.xlu0 %v779
    %v858 = vpop.xlane.xlu0 %857
    %859 = vmax.xlane.f32.xlu0 %v783
    %v860 = vpop.xlane.xlu0 %859
    %861 = vmax.xlane.f32.xlu0 %v787
    %v862 = vpop.xlane.xlu0 %861
    %863 = vmax.xlane.f32.xlu0 %v791
    %v864 = vpop.xlane.xlu0 %863
    %865 = vmax.xlane.f32.xlu0 %v795
    %v866 = vpop.xlane.xlu0 %865
    %867 = vmax.xlane.f32.xlu0 %v799
    %v868 = vpop.xlane.xlu0 %867
    %869 = vmax.xlane.f32.xlu0 %v803
    %v870 = vpop.xlane.xlu0 %869
    %871 = vmax.xlane.f32.xlu0 %v807
    %v872 = vpop.xlane.xlu0 %871
    %873 = vmax.xlane.f32.xlu0 %v811
    %v874 = vpop.xlane.xlu0 %873
    %875 = vmax.xlane.f32.xlu0 %v815
    %v876 = vpop.xlane.xlu0 %875
    %877 = vmax.xlane.f32.xlu0 %v819
    %v878 = vpop.xlane.xlu0 %877
    %879 = vmax.xlane.f32.xlu0 %v823
    %v880 = vpop.xlane.xlu0 %879
    %881 = vmax.xlane.f32.xlu0 %v827
    %v882 = vpop.xlane.xlu0 %881
    %883 = vmax.xlane.f32.xlu0 %v831
    %v884 = vpop.xlane.xlu0 %883
    %885 = vmax.xlane.f32.xlu0 %v835
    %v886 = vpop.xlane.xlu0 %885
    %887 = vmax.xlane.f32.xlu0 %v839
    %v888 = vpop.xlane.xlu0 %887
    %v889 = vsub.f32 %v779, %v858
    %v890 = vsub.f32 %v783, %v860
    %v891 = vsub.f32 %v787, %v862
    %v892 = vsub.f32 %v791, %v864
    %v893 = vsub.f32 %v795, %v866
    %v894 = vsub.f32 %v799, %v868
    %v895 = vsub.f32 %v803, %v870
    %v896 = vsub.f32 %v807, %v872
    %v897 = vsub.f32 %v811, %v874
    %v898 = vsub.f32 %v815, %v876
    %v899 = vsub.f32 %v819, %v878
    %v900 = vsub.f32 %v823, %v880
    %v901 = vsub.f32 %v827, %v882
    %v902 = vsub.f32 %v831, %v884
    %v903 = vsub.f32 %v835, %v886
    %v904 = vsub.f32 %v839, %v888
    %v905 = vmul.f32 %v889, 1.442695
    %v906 = vpow.pop %v905
    %v907 = vmul.f32 %v890, 1.442695
    %v908 = vpow.pop %v907
    %v909 = vmul.f32 %v891, 1.442695
    %v910 = vpow.pop %v909
    %v911 = vmul.f32 %v892, 1.442695
    %v912 = vpow.pop %v911
    %v913 = vmul.f32 %v893, 1.442695
    %v914 = vpow.pop %v913
    %v915 = vmul.f32 %v894, 1.442695
    %v916 = vpow.pop %v915
    %v917 = vmul.f32 %v895, 1.442695
    %v918 = vpow.pop %v917
    %v919 = vmul.f32 %v896, 1.442695
    %v920 = vpow.pop %v919
    %v921 = vmul.f32 %v897, 1.442695
    %v922 = vpow.pop %v921
    %v923 = vmul.f32 %v898, 1.442695
    %v924 = vpow.pop %v923
    %v925 = vmul.f32 %v899, 1.442695
    %v926 = vpow.pop %v925
    %v927 = vmul.f32 %v900, 1.442695
    %v928 = vpow.pop %v927
    %v929 = vmul.f32 %v901, 1.442695
    %v930 = vpow.pop %v929
    %v931 = vmul.f32 %v902, 1.442695
    %v932 = vpow.pop %v931
    %v933 = vmul.f32 %v903, 1.442695
    %v934 = vpow.pop %v933
    %v935 = vmul.f32 %v904, 1.442695
    %v936 = vpow.pop %v935
    %937 = vadd.xlane.f32.xlu0 %v906
    %v938 = vpop.xlane.xlu0 %937
    %939 = vadd.xlane.f32.xlu0 %v908
    %v940 = vpop.xlane.xlu0 %939
    %941 = vadd.xlane.f32.xlu0 %v910
    %v942 = vpop.xlane.xlu0 %941
    %943 = vadd.xlane.f32.xlu0 %v912
    %v944 = vpop.xlane.xlu0 %943
    %945 = vadd.xlane.f32.xlu0 %v914
    %v946 = vpop.xlane.xlu0 %945
    %947 = vadd.xlane.f32.xlu0 %v916
    %v948 = vpop.xlane.xlu0 %947
    %949 = vadd.xlane.f32.xlu0 %v918
    %v950 = vpop.xlane.xlu0 %949
    %951 = vadd.xlane.f32.xlu0 %v920
    %v952 = vpop.xlane.xlu0 %951
    %953 = vadd.xlane.f32.xlu0 %v922
    %v954 = vpop.xlane.xlu0 %953
    %955 = vadd.xlane.f32.xlu0 %v924
    %v956 = vpop.xlane.xlu0 %955
    %957 = vadd.xlane.f32.xlu0 %v926
    %v958 = vpop.xlane.xlu0 %957
    %959 = vadd.xlane.f32.xlu0 %v928
    %v960 = vpop.xlane.xlu0 %959
    %961 = vadd.xlane.f32.xlu0 %v930
    %v962 = vpop.xlane.xlu0 %961
    %963 = vadd.xlane.f32.xlu0 %v932
    %v964 = vpop.xlane.xlu0 %963
    %965 = vadd.xlane.f32.xlu0 %v934
    %v966 = vpop.xlane.xlu0 %965
    %967 = vadd.xlane.f32.xlu0 %v936
    %v968 = vpop.xlane.xlu0 %967
    %v969 = vlog2.pop %v938
    %v970 = vmul.f32 %v969, 0.6931472
    %v971 = vlog2.pop %v940
    %v972 = vmul.f32 %v971, 0.6931472
    %v973 = vlog2.pop %v942
    %v974 = vmul.f32 %v973, 0.6931472
    %v975 = vlog2.pop %v944
    %v976 = vmul.f32 %v975, 0.6931472
    %v977 = vlog2.pop %v946
    %v978 = vmul.f32 %v977, 0.6931472
    %v979 = vlog2.pop %v948
    %v980 = vmul.f32 %v979, 0.6931472
    %v981 = vlog2.pop %v950
    %v982 = vmul.f32 %v981, 0.6931472
    %v983 = vlog2.pop %v952
    %v984 = vmul.f32 %v983, 0.6931472
    %v985 = vlog2.pop %v954
    %v986 = vmul.f32 %v985, 0.6931472
    %v987 = vlog2.pop %v956
    %v988 = vmul.f32 %v987, 0.6931472
    %v989 = vlog2.pop %v958
    %v990 = vmul.f32 %v989, 0.6931472
    %v991 = vlog2.pop %v960
    %v992 = vmul.f32 %v991, 0.6931472
    %v993 = vlog2.pop %v962
    %v994 = vmul.f32 %v993, 0.6931472
    %v995 = vlog2.pop %v964
    %v996 = vmul.f32 %v995, 0.6931472
    %v997 = vlog2.pop %v966
    %v998 = vmul.f32 %v997, 0.6931472
    %v999 = vlog2.pop %v968
    %v1000 = vmul.f32 %v999, 0.6931472
    %v1001 = vadd.f32 %v858, %v970
    %v1002 = vadd.f32 %v860, %v972
    %v1003 = vadd.f32 %v862, %v974
    %v1004 = vadd.f32 %v864, %v976
    %v1005 = vadd.f32 %v866, %v978
    %v1006 = vadd.f32 %v868, %v980
    %v1007 = vadd.f32 %v870, %v982
    %v1008 = vadd.f32 %v872, %v984
    %v1009 = vadd.f32 %v874, %v986
    %v1010 = vadd.f32 %v876, %v988
    %v1011 = vadd.f32 %v878, %v990
    %v1012 = vadd.f32 %v880, %v992
    %v1013 = vadd.f32 %v882, %v994
    %v1014 = vadd.f32 %v884, %v996
    %v1015 = vadd.f32 %v886, %v998
    %v1016 = vadd.f32 %v888, %v1000
    %v1017 = vld [vmem:[%s1] sm:$0xff]
    %v1018 = vld [vmem:[%s1 + $0x8] sm:$0xff]
    %v1019 = vld [vmem:[%s1 + $0x10] sm:$0xff]
    %v1020 = vld [vmem:[%s1 + $0x18] sm:$0xff]
    %v1021 = vld [vmem:[%s1 + $0x20] sm:$0xff]
    %v1022 = vld [vmem:[%s1 + $0x28] sm:$0xff]
    %v1023 = vld [vmem:[%s1 + $0x30] sm:$0xff]
    %v1024 = vld [vmem:[%s1 + $0x38] sm:$0xff]
    %v1025 = vld [vmem:[%s1 + $0x40] sm:$0xff]
    %v1026 = vld [vmem:[%s1 + $0x48] sm:$0xff]
    %v1027 = vld [vmem:[%s1 + $0x50] sm:$0xff]
    %v1028 = vld [vmem:[%s1 + $0x58] sm:$0xff]
    %v1029 = vld [vmem:[%s1 + $0x60] sm:$0xff]
    %v1030 = vld [vmem:[%s1 + $0x68] sm:$0xff]
    %v1031 = vld [vmem:[%s1 + $0x70] sm:$0xff]
    %v1032 = vld [vmem:[%s1 + $0x78] sm:$0xff]
    %1033 = vset.pattern.permute.xlu0 0
    %1034 = vperm.xlu0 %1033, %v1017
    %v1035 = vpop.permute.xlu0 %1034
    %1036 = vset.pattern.permute.xlu0 0
    %1037 = vperm.xlu0 %1036, %v1018
    %v1038 = vpop.permute.xlu0 %1037
    %1039 = vset.pattern.permute.xlu0 0
    %1040 = vperm.xlu0 %1039, %v1019
    %v1041 = vpop.permute.xlu0 %1040
    %1042 = vset.pattern.permute.xlu0 0
    %1043 = vperm.xlu0 %1042, %v1020
    %v1044 = vpop.permute.xlu0 %1043
    %1045 = vset.pattern.permute.xlu0 0
    %1046 = vperm.xlu0 %1045, %v1021
    %v1047 = vpop.permute.xlu0 %1046
    %1048 = vset.pattern.permute.xlu0 0
    %1049 = vperm.xlu0 %1048, %v1022
    %v1050 = vpop.permute.xlu0 %1049
    %1051 = vset.pattern.permute.xlu0 0
    %1052 = vperm.xlu0 %1051, %v1023
    %v1053 = vpop.permute.xlu0 %1052
    %1054 = vset.pattern.permute.xlu0 0
    %1055 = vperm.xlu0 %1054, %v1024
    %v1056 = vpop.permute.xlu0 %1055
    %1057 = vset.pattern.permute.xlu0 0
    %1058 = vperm.xlu0 %1057, %v1025
    %v1059 = vpop.permute.xlu0 %1058
    %1060 = vset.pattern.permute.xlu0 0
    %1061 = vperm.xlu0 %1060, %v1026
    %v1062 = vpop.permute.xlu0 %1061
    %1063 = vset.pattern.permute.xlu0 0
    %1064 = vperm.xlu0 %1063, %v1027
    %v1065 = vpop.permute.xlu0 %1064
    %1066 = vset.pattern.permute.xlu0 0
    %1067 = vperm.xlu0 %1066, %v1028
    %v1068 = vpop.permute.xlu0 %1067
    %1069 = vset.pattern.permute.xlu0 0
    %1070 = vperm.xlu0 %1069, %v1029
    %v1071 = vpop.permute.xlu0 %1070
    %1072 = vset.pattern.permute.xlu0 0
    %1073 = vperm.xlu0 %1072, %v1030
    %v1074 = vpop.permute.xlu0 %1073
    %1075 = vset.pattern.permute.xlu0 0
    %1076 = vperm.xlu0 %1075, %v1031
    %v1077 = vpop.permute.xlu0 %1076
    %1078 = vset.pattern.permute.xlu0 0
    %1079 = vperm.xlu0 %1078, %v1032
    %v1080 = vpop.permute.xlu0 %1079
    %vm1081 = vcmp.eq.s32.totalorder %v41, %v1035
    %vm1082 = vcmp.eq.s32.totalorder %v41, %v1038
    %vm1083 = vcmp.eq.s32.totalorder %v41, %v1041
    %vm1084 = vcmp.eq.s32.totalorder %v41, %v1044
    %vm1085 = vcmp.eq.s32.totalorder %v41, %v1047
    %vm1086 = vcmp.eq.s32.totalorder %v41, %v1050
    %vm1087 = vcmp.eq.s32.totalorder %v41, %v1053
    %vm1088 = vcmp.eq.s32.totalorder %v41, %v1056
    %vm1089 = vcmp.eq.s32.totalorder %v41, %v1059
    %vm1090 = vcmp.eq.s32.totalorder %v41, %v1062
    %vm1091 = vcmp.eq.s32.totalorder %v41, %v1065
    %vm1092 = vcmp.eq.s32.totalorder %v41, %v1068
    %vm1093 = vcmp.eq.s32.totalorder %v41, %v1071
    %vm1094 = vcmp.eq.s32.totalorder %v41, %v1074
    %vm1095 = vcmp.eq.s32.totalorder %v41, %v1077
    %vm1096 = vcmp.eq.s32.totalorder %v41, %v1080
    %v1097 = vsel %vm1081, %v779, 0.0
    %v1098 = vsel %vm1082, %v783, 0.0
    %v1099 = vsel %vm1083, %v787, 0.0
    %v1100 = vsel %vm1084, %v791, 0.0
    %v1101 = vsel %vm1085, %v795, 0.0
    %v1102 = vsel %vm1086, %v799, 0.0
    %v1103 = vsel %vm1087, %v803, 0.0
    %v1104 = vsel %vm1088, %v807, 0.0
    %v1105 = vsel %vm1089, %v811, 0.0
    %v1106 = vsel %vm1090, %v815, 0.0
    %v1107 = vsel %vm1091, %v819, 0.0
    %v1108 = vsel %vm1092, %v823, 0.0
    %v1109 = vsel %vm1093, %v827, 0.0
    %v1110 = vsel %vm1094, %v831, 0.0
    %v1111 = vsel %vm1095, %v835, 0.0
    %v1112 = vsel %vm1096, %v839, 0.0
    %1113 = vadd.xlane.f32.xlu0 %v1097
    %v1114 = vpop.xlane.xlu0 %1113
    %1115 = vadd.xlane.f32.xlu0 %v1098
    %v1116 = vpop.xlane.xlu0 %1115
    %1117 = vadd.xlane.f32.xlu0 %v1099
    %v1118 = vpop.xlane.xlu0 %1117
    %1119 = vadd.xlane.f32.xlu0 %v1100
    %v1120 = vpop.xlane.xlu0 %1119
    %1121 = vadd.xlane.f32.xlu0 %v1101
    %v1122 = vpop.xlane.xlu0 %1121
    %1123 = vadd.xlane.f32.xlu0 %v1102
    %v1124 = vpop.xlane.xlu0 %1123
    %1125 = vadd.xlane.f32.xlu0 %v1103
    %v1126 = vpop.xlane.xlu0 %1125
    %1127 = vadd.xlane.f32.xlu0 %v1104
    %v1128 = vpop.xlane.xlu0 %1127
    %1129 = vadd.xlane.f32.xlu0 %v1105
    %v1130 = vpop.xlane.xlu0 %1129
    %1131 = vadd.xlane.f32.xlu0 %v1106
    %v1132 = vpop.xlane.xlu0 %1131
    %1133 = vadd.xlane.f32.xlu0 %v1107
    %v1134 = vpop.xlane.xlu0 %1133
    %1135 = vadd.xlane.f32.xlu0 %v1108
    %v1136 = vpop.xlane.xlu0 %1135
    %1137 = vadd.xlane.f32.xlu0 %v1109
    %v1138 = vpop.xlane.xlu0 %1137
    %1139 = vadd.xlane.f32.xlu0 %v1110
    %v1140 = vpop.xlane.xlu0 %1139
    %1141 = vadd.xlane.f32.xlu0 %v1111
    %v1142 = vpop.xlane.xlu0 %1141
    %1143 = vadd.xlane.f32.xlu0 %v1112
    %v1144 = vpop.xlane.xlu0 %1143
    %s1145 = smul.u32 0, 128
    %v1146 = vlaneseq
    %v1147 = vshrl.u32 %v1146, 7
    %v1148 = vadd.s32 %v1147, 8
    %v1149 = vadd.s32 %v1147, 16
    %v1150 = vadd.s32 %v1147, 24
    %v1151 = vadd.s32 %v1147, 32
    %v1152 = vadd.s32 %v1147, 40
    %v1153 = vadd.s32 %v1147, 48
    %v1154 = vadd.s32 %v1147, 56
    %v1155 = vadd.s32 %v1147, 64
    %v1156 = vadd.s32 %v1147, 72
    %v1157 = vadd.s32 %v1147, 80
    %v1158 = vadd.s32 %v1147, 88
    %v1159 = vadd.s32 %v1147, 96
    %v1160 = vadd.s32 %v1147, 104
    %v1161 = vadd.s32 %v1147, 112
    %v1162 = vadd.s32 %v1147, 120
    %v1163 = vstv %s1145
    %v1164 = vadd.s32 %v1163, %v1147
    %v1165 = vadd.s32 %v1163, %v1148
    %v1166 = vadd.s32 %v1163, %v1149
    %v1167 = vadd.s32 %v1163, %v1150
    %v1168 = vadd.s32 %v1163, %v1151
    %v1169 = vadd.s32 %v1163, %v1152
    %v1170 = vadd.s32 %v1163, %v1153
    %v1171 = vadd.s32 %v1163, %v1154
    %v1172 = vadd.s32 %v1163, %v1155
    %v1173 = vadd.s32 %v1163, %v1156
    %v1174 = vadd.s32 %v1163, %v1157
    %v1175 = vadd.s32 %v1163, %v1158
    %v1176 = vadd.s32 %v1163, %v1159
    %v1177 = vadd.s32 %v1163, %v1160
    %v1178 = vadd.s32 %v1163, %v1161
    %v1179 = vadd.s32 %v1163, %v1162
    %vm1180 = vcmp.lt.s32.totalorder %v1164, 16
    %vm1181 = vcmp.lt.s32.totalorder %v1165, 16
    %vm1182 = vcmp.lt.s32.totalorder %v1166, 16
    %vm1183 = vcmp.lt.s32.totalorder %v1167, 16
    %vm1184 = vcmp.lt.s32.totalorder %v1168, 16
    %vm1185 = vcmp.lt.s32.totalorder %v1169, 16
    %vm1186 = vcmp.lt.s32.totalorder %v1170, 16
    %vm1187 = vcmp.lt.s32.totalorder %v1171, 16
    %vm1188 = vcmp.lt.s32.totalorder %v1172, 16
    %vm1189 = vcmp.lt.s32.totalorder %v1173, 16
    %vm1190 = vcmp.lt.s32.totalorder %v1174, 16
    %vm1191 = vcmp.lt.s32.totalorder %v1175, 16
    %vm1192 = vcmp.lt.s32.totalorder %v1176, 16
    %vm1193 = vcmp.lt.s32.totalorder %v1177, 16
    %vm1194 = vcmp.lt.s32.totalorder %v1178, 16
    %vm1195 = vcmp.lt.s32.totalorder %v1179, 16
    %v1196 = vsub.f32 %v1001, %v1114
    %v1197 = vsub.f32 %v1002, %v1116
    %v1198 = vsub.f32 %v1003, %v1118
    %v1199 = vsub.f32 %v1004, %v1120
    %v1200 = vsub.f32 %v1005, %v1122
    %v1201 = vsub.f32 %v1006, %v1124
    %v1202 = vsub.f32 %v1007, %v1126
    %v1203 = vsub.f32 %v1008, %v1128
    %v1204 = vsub.f32 %v1009, %v1130
    %v1205 = vsub.f32 %v1010, %v1132
    %v1206 = vsub.f32 %v1011, %v1134
    %v1207 = vsub.f32 %v1012, %v1136
    %v1208 = vsub.f32 %v1013, %v1138
    %v1209 = vsub.f32 %v1014, %v1140
    %v1210 = vsub.f32 %v1015, %v1142
    %v1211 = vsub.f32 %v1016, %v1144
    %v1212 = vsel %vm1180, %v1196, 0.0
    %v1213 = vsel %vm1181, %v1197, 0.0
    %v1214 = vsel %vm1182, %v1198, 0.0
    %v1215 = vsel %vm1183, %v1199, 0.0
    %v1216 = vsel %vm1184, %v1200, 0.0
    %v1217 = vsel %vm1185, %v1201, 0.0
    %v1218 = vsel %vm1186, %v1202, 0.0
    %v1219 = vsel %vm1187, %v1203, 0.0
    %v1220 = vsel %vm1188, %v1204, 0.0
    %v1221 = vsel %vm1189, %v1205, 0.0
    %v1222 = vsel %vm1190, %v1206, 0.0
    %v1223 = vsel %vm1191, %v1207, 0.0
    %v1224 = vsel %vm1192, %v1208, 0.0
    %v1225 = vsel %vm1193, %v1209, 0.0
    %v1226 = vsel %vm1194, %v1210, 0.0
    %v1227 = vsel %vm1195, %v1211, 0.0
    %v1228 = vld [vmem:[#allocation4] sm:$0x1]
    %v1229 = vadd.f32 %v1212, %v1213
    %v1230 = vadd.f32 %v1229, %v1214
    %v1231 = vadd.f32 %v1230, %v1215
    %v1232 = vadd.f32 %v1231, %v1216
    %v1233 = vadd.f32 %v1232, %v1217
    %v1234 = vadd.f32 %v1233, %v1218
    %v1235 = vadd.f32 %v1234, %v1219
    %v1236 = vadd.f32 %v1235, %v1220
    %v1237 = vadd.f32 %v1236, %v1221
    %v1238 = vadd.f32 %v1237, %v1222
    %v1239 = vadd.f32 %v1238, %v1223
    %v1240 = vadd.f32 %v1239, %v1224
    %v1241 = vadd.f32 %v1240, %v1225
    %v1242 = vadd.f32 %v1241, %v1226
    %v1243 = vadd.f32 %v1242, %v1227
    %v1244 = vrot.slane %v1243, 4
    %v1245 = vadd.f32 %v1243, %v1244
    %v1246 = vrot.slane %v1245, 2
    %v1247 = vadd.f32 %v1245, %v1246
    %v1248 = vrot.slane %v1247, 1
    %v1249 = vadd.f32 %v1247, %v1248
    %v1250 = vadd.f32 %v1228, %v1249
    %vm1251 = vcmask 0
    %1252 = vst.msk [vmem:[#allocation4] sm:$0x1] %vm1251, %v1250
    // Predicated region
    $region18: #{tpu_custom_call.1} parent=1 // pred_check
      %p1253 = pneg %p18
    $region19: #{tpu_custom_call.1} parent=1 // pred_check_branch
      %1255 = sbr.rel (%p1253) target = $region21
    $region20: #{tpu_custom_call.1} parent=1 // pred_region
      %v1256 = vld [vmem:[#allocation4] sm:$0x1]
      %v1257 = vmul.f32 %v1256, 0.0625
      %1258 = vst.msk [vmem:[#allocation4] sm:$0x1] %vm1251, %v1257
    $region21: #{tpu_custom_call.1} parent=1 // pred_fallthru
      _
    // Predicated region
    $region22: #{tpu_custom_call.1} parent=1 // pred_check
      _
    $region23: #{tpu_custom_call.1} parent=1 // pred_check_branch
      %1260 = sbr.rel (0) target = $region25
    $region24: #{tpu_custom_call.1} parent=1 // pred_region
      %1262 = vsyncadd [#allocation3], 0
      %s1263 = sshll.u32 [#allocation2], 4
      %s1264 = int_to_ptr.vmem [resolvable:$true] %s1263
      %s1265 = sshll.u32 %s3, 4
      %s1266 = int_to_ptr.hbm [resolvable:$true] %s1265
      %1271 = dma.vmem_to_hbm [thread:$0]  %s1264, 2048, %s1266, [#allocation3], 128, 128, 8
    $region25: #{tpu_custom_call.1} parent=1 // pred_fallthru
      _
    // Predicated region
    $region26: #{tpu_custom_call.1} parent=1 // pred_check
      _
    $region27: #{tpu_custom_call.1} parent=1 // pred_check_branch
      %1273 = sbr.rel (0) target = $region29
    $region28: #{tpu_custom_call.1} parent=1 // pred_region
      %1275 = vsyncadd [#allocation5], 0
      %s1277 = sshll.u32 [#allocation4], 4
      %s1278 = int_to_ptr.vmem [resolvable:$true] %s1277
      %s1279 = sshll.u32 %s4, 4
      %s1280 = int_to_ptr.hbm [resolvable:$true] %s1279
      %1282 = dma.vmem_to_hbm [thread:$0]  %s1278, 16, %s1280, [#allocation5]
    $region29: #{tpu_custom_call.1} parent=1 // pred_fallthru
      _
    // Predicated region
    $region30: #{tpu_custom_call.1} parent=1 // pred_check
      _
    $region31: #{tpu_custom_call.1} parent=1 // pred_check_branch
      %1284 = sbr.rel (0) target = $region33
    $region32: #{tpu_custom_call.1} parent=1 // pred_region
      %1286 = dma.done [#allocation3], 2048
    $region33: #{tpu_custom_call.1} parent=1 // pred_fallthru
      _
    // Predicated region
    $region34: #{tpu_custom_call.1} parent=1 // pred_check
      _
    $region35: #{tpu_custom_call.1} parent=1 // pred_check_branch
      %1288 = sbr.rel (0) target = $region37
    $region36: #{tpu_custom_call.1} parent=1 // pred_region
      %1290 = dma.done [#allocation5], 16
    $region37: #{tpu_custom_call.1} parent=1 // pred_fallthru
      _
    %1291 = vsyncpa [#allocation3], 1
    %1292 = vsyncpa [#allocation5], 1

</llo_original>
